<compile_context>
chip_gen: v5e
topology: v5e:2x2
jax: 0.10.0
libtpu: 0.0.40
codegen_flags: <defaults>
</compile_context>

<pallas_src>
import numpy as np
import jax
import jax.numpy as jnp
from jax.experimental import pallas as pl
from jax.experimental.pallas import tpu as pltpu

# Constants baked into the PyTorch module
MU_UP = 0.274
DT = 0.5
DX = 100.0 / 48.0
KSIZE = 5
PAD = 2  # circular padding width on each spatial side

# Order of the 10 bivariate-cubic monomial coefficients c[i, j] (u^i * v^j) in the packed
# SMEM vector: c00,c10,c20,c30, c01,c11,c21, c02,c12, c03
_COEFF_ORDER = [(0, 0), (1, 0), (2, 0), (3, 0),
                (0, 1), (1, 1), (2, 1),
                (0, 2), (1, 2),
                (0, 3)]


# ----------------------------------------------------------------------------- helpers

def _pick_row_tile(R, B, max_rows=1024, min_tiles=4):
    """Largest divisor of R (multiple of 8, or R itself) that is <= max_rows, preferring
    choices that leave >= min_tiles grid steps so v7x's two TensorCores stay busy."""
    cands = [d for d in range(1, R + 1) if R % d == 0 and (d % 8 == 0 or d == R)]
    for d in sorted(cands, reverse=True):
        if d <= max_rows and B * (R // d) >= min_tiles:
            return d
    for d in sorted(cands, reverse=True):
        if d <= max_rows:
            return d
    # TODO(synk): for large prime-ish R, pad R up instead of using a whole-R tile.
    return R


# ----------------------------------------------------------------- pointwise/update kernel

def _make_pointwise_kernel(has_lap):
    """Bivariate-cubic nonlinearity + optional diffusion add + explicit Euler update.

    params SMEM layout (f32 vector, length 22):
      [0] = mu_up*sigmoid(CA), [1] = mu_up*sigmoid(CB)
      [2..11]  = u-branch cubic coefficients in _COEFF_ORDER
      [12..21] = v-branch cubic coefficients in _COEFF_ORDER
    """

    def body(p_ref, x_ref, lap_ref, out_ref):
        # x_ref / lap_ref / out_ref blocks: (1, 2, TR, 128)  (lane-dense spatial)
        u = x_ref[0, 0].astype(jnp.float32)   # (TR, 128)
        v = x_ref[0, 1].astype(jnp.float32)   # (TR, 128)
        for ch in range(2):                   # 0 = u-branch, 1 = v-branch
            base = 2 + 10 * ch
            c00 = p_ref[base + 0]; c10 = p_ref[base + 1]
            c20 = p_ref[base + 2]; c30 = p_ref[base + 3]
            c01 = p_ref[base + 4]; c11 = p_ref[base + 5]; c21 = p_ref[base + 6]
            c02 = p_ref[base + 7]; c12 = p_ref[base + 8]
            c03 = p_ref[base + 9]
            # Horner in u for each v-power, then Horner in v: ~9 FMAs per branch (VPU only).
            a0 = c00 + u * (c10 + u * (c20 + u * c30))
            a1 = c01 + u * (c11 + u * c21)
            a2 = c02 + u * c12
            res = a0 + v * (a1 + v * (a2 + v * c03))
            if has_lap:
                res = res + p_ref[ch] * lap_ref[0, ch]          # mu_up*sigmoid(C)*laplacian
            prev = u if ch == 0 else v
            out_ref[0, ch] = (prev + res * DT).astype(out_ref.dtype)   # explicit Euler step

    if has_lap:
        def kernel(p_ref, x_ref, lap_ref, out_ref):
            body(p_ref, x_ref, lap_ref, out_ref)
    else:
        def kernel(p_ref, x_ref, out_ref):
            body(p_ref, x_ref, None, out_ref)
    return kernel


# --------------------------------------------------------------------- 5x5x5 stencil kernel

def _laplace_pallas(h, taps):
    """Circular 5x5x5 'valid' convolution; only the (trace-time) nonzero taps are computed.

    Runs per (batch, channel) in NCDHW layout so the spatial W axis (not a width-2 channel
    axis) maps to the 128-lane axis.  Returns the Laplacian in the lane-dense
    [B, 2, R, 128] layout used by the main kernel.  Only called when the stencil has
    nonzero weights (the module as written has none).
    """
    B, C, D, H, W = h.shape
    Dp, Hp, Wp = D + 2 * PAD, H + 2 * PAD, W + 2 * PAD
    R = (D * H * W) // 128

    # TODO(synk): do the circular wrap in-kernel (roll / modular slab DMA) to drop this
    # extra full-volume HBM pass, and slab-tile over D (with 2*PAD halo) + raise
    # vmem_limit_bytes for production-size volumes; whole-volume-per-(b,c) is fine here.
    h_pad = jnp.pad(h, ((0, 0), (0, 0), (PAD, PAD), (PAD, PAD), (PAD, PAD)), mode="wrap")

    def kernel(hpad_ref, lap_ref):
        hp = hpad_ref[0, 0]                       # (Dp, Hp, Wp); W on the lane axis
        acc = jnp.zeros((D, H, W), jnp.float32)
        for kd, kh, kw, wgt in taps:              # static; zero taps already elided
            acc = acc + wgt * hp[kd:kd + D, kh:kh + H, kw:kw + W]
        lap_ref[0, 0] = acc

    lap = pl.pallas_call(
        kernel,
        out_shape=jax.ShapeDtypeStruct((B, C, D, H, W), jnp.float32),
        grid=(B, C),
        in_specs=[pl.BlockSpec((1, 1, Dp, Hp, Wp), lambda b, c: (b, c, 0, 0, 0))],
        out_specs=pl.BlockSpec((1, 1, D, H, W), lambda b, c: (b, c, 0, 0, 0)),
        compiler_params=pltpu.CompilerParams(
            dimension_semantics=("parallel", "parallel")),
    )(h_pad)

    return lap.reshape(B, C, R, 128)   # row-major reshape: free


# --------------------------------------------------------------------------------- forward

def rcnn_cell_forward(h, packed, state_dtype=jnp.float32):
    """h: [B, 2, D, H, W] float32 (NCDHW, like the PyTorch module). Returns (ch, ch).

    state_dtype: dtype of the state's HBM round-trip through the pointwise kernel
    (compute is always f32).  bfloat16 halves HBM traffic but deviates from f32 numerics.
    """
    B, C, D, H, W = h.shape
    assert C == 2
    N = D * H * W
    # TODO(synk): pad N up to a multiple of 128 for grids where D*H*W % 128 != 0.
    assert N % 128 == 0, "D*H*W must be a multiple of 128 for the lane-dense layout"
    R = N // 128
    TR = _pick_row_tile(R, B)

    # Laplace stencil is a fixed (non-trainable) buffer -> bake it at trace time and
    # elide zero taps.  The module's laplace_3d is all zeros, so usually taps == [].
    try:
        lap_w = np.asarray(packed["lap_w"], np.float32)
    except Exception as e:
        raise ValueError(
            "lap_w must be a concrete (requires_grad=False) buffer; its taps are baked "
            "into the kernel at trace time and cannot be traced/trained.") from e
    taps = [(kd, kh, kw, float(lap_w[kd, kh, kw]))
            for kd in range(KSIZE) for kh in range(KSIZE) for kw in range(KSIZE)
            if float(lap_w[kd, kh, kw]) != 0.0]
    has_lap = bool(taps)

    # single packed SMEM parameter vector: [coef_u, coef_v, 2 x 10 cubic coefficients]
    coef = (MU_UP * jax.nn.sigmoid(jnp.stack([packed["CA"], packed["CB"]]))).astype(jnp.float32)
    params_vec = jnp.concatenate([coef, packed["poly_coeffs"]])

    # free, row-major reshape: NCDHW -> [B, 2, R, 128] (spatial on the 128-lane axis)
    x = h.reshape(B, 2, R, 128).astype(state_dtype)

    inputs = [params_vec, x]
    in_specs = [
        pl.BlockSpec(memory_space=pltpu.MemorySpace.SMEM),                 # packed scalars
        pl.BlockSpec((1, 2, TR, 128), lambda b, t: (b, 0, t, 0)),          # state tile
    ]
    if has_lap:
        lap = _laplace_pallas(h.astype(jnp.float32), taps)                 # [B, 2, R, 128]
        inputs.append(lap)
        in_specs.append(pl.BlockSpec((1, 2, TR, 128), lambda b, t: (b, 0, t, 0)))

    kernel = _make_pointwise_kernel(has_lap)

    out = pl.pallas_call(
        kernel,
        out_shape=jax.ShapeDtypeStruct((B, 2, R, 128), state_dtype),
        grid=(B, R // TR),
        in_specs=in_specs,
        out_specs=pl.BlockSpec((1, 2, TR, 128), lambda b, t: (b, 0, t, 0)),
        compiler_params=pltpu.CompilerParams(
            dimension_semantics=("parallel", "parallel")),
    )(*inputs)

    ch = out.reshape(B, 2, D, H, W)
    return ch, ch


# ----------------------------------------------------------------------- parameters / pack

def init_params(hidden_channels, c=0.01):
    """Deterministic re-creation of the module's __init__ (shapes identical to PyTorch)."""
    np.random.seed(1234)
    CA = np.float32((np.random.rand() - 0.5) * 2)
    CB = np.float32((np.random.rand() - 0.5) * 2)

    # laplace_3d is an all-zeros (1,1,5,5,5) array in the reference source.
    laplace_3d = np.zeros((KSIZE, KSIZE, KSIZE), dtype=np.float32)
    lap_w = (1.0 / DX ** 2) * laplace_3d

    rng = np.random.RandomState(42)

    def conv1x1(in_c, out_c):
        bound = np.sqrt(6.0 / (in_c + out_c))  # Xavier uniform for a 1x1x1 conv
        w = (c * rng.uniform(-bound, bound, size=(out_c, in_c))).astype(np.float32)
        b = np.zeros((out_c,), np.float32)     # biases filled with 0 in init_filter
        return w, b

    Hc = hidden_channels
    W1u, b1u = conv1x1(2, Hc); W2u, b2u = conv1x1(2, Hc); W3u, b3u = conv1x1(2, Hc)
    W4u, b4u = conv1x1(Hc, 1)
    W1v, b1v = conv1x1(2, Hc); W2v, b2v = conv1x1(2, Hc); W3v, b3v = conv1x1(2, Hc)
    W4v, b4v = conv1x1(Hc, 1)

    return dict(CA=CA, CB=CB, lap_w=lap_w,
                W1u=W1u, b1u=b1u, W2u=W2u, b2u=b2u, W3u=W3u, b3u=b3u, W4u=W4u, b4u=b4u,
                W1v=W1v, b1v=b1v, W2v=W2v, b2v=b2v, W3v=W3v, b3v=b3v, W4v=W4v, b4v=b4v)


def _branch_cubic_coeffs(W1, b1, W2, b2, W3, b3, W4, b4):
    """Expand sum_hc W4[0,hc]*(W1 h)*(W2 h)*(W3 h) + b4 into c[i,j] * u^i * v^j (float64)."""
    def affine(Wm, bm, hc):
        a = np.zeros((4, 4), np.float64)
        a[1, 0] = Wm[hc, 0]   # u coefficient
        a[0, 1] = Wm[hc, 1]   # v coefficient
        a[0, 0] = bm[hc]      # bias
        return a

    def polymul(A, Bp):
        out = np.zeros((4, 4), np.float64)
        for i in range(4):
            for j in range(4):
                if A[i, j] == 0.0:
                    continue
                for k in range(4 - i):
                    for l in range(4 - j):
                        if Bp[k, l] != 0.0:
                            out[i + k, j + l] += A[i, j] * Bp[k, l]
        return out

    Hc = W1.shape[0]
    c = np.zeros((4, 4), np.float64)
    for hc in range(Hc):
        p = polymul(polymul(affine(W1, b1, hc), affine(W2, b2, hc)), affine(W3, b3, hc))
        c = c + np.float64(W4[0, hc]) * p
    c[0, 0] += np.float64(b4[0])
    return c


def pack_params(p, hidden_channels):
    """Collapse the torch-style per-hc weights into 10 cubic coefficients per branch
    (expansion in float64, cast to f32) plus CA/CB and the static Laplace buffer."""
    vec = []
    for br in ("u", "v"):
        c = _branch_cubic_coeffs(
            np.asarray(p[f"W1{br}"], np.float64), np.asarray(p[f"b1{br}"], np.float64),
            np.asarray(p[f"W2{br}"], np.float64), np.asarray(p[f"b2{br}"], np.float64),
            np.asarray(p[f"W3{br}"], np.float64), np.asarray(p[f"b3{br}"], np.float64),
            np.asarray(p[f"W4{br}"], np.float64), np.asarray(p[f"b4{br}"], np.float64))
        vec += [c[i, j] for (i, j) in _COEFF_ORDER]
    return dict(
        poly_coeffs=jnp.asarray(np.asarray(vec, np.float64).astype(np.float32)),
        CA=jnp.asarray(p["CA"], jnp.float32),
        CB=jnp.asarray(p["CB"], jnp.float32),
        lap_w=np.asarray(p["lap_w"], np.float32),   # static buffer, baked at trace time
        hidden_channels=hidden_channels,
    )


# --------------------------------------------------------------------------- JAX reference

def reference_forward(h, p):
    """Pure-JAX (XLA) reference matching the PyTorch forward exactly."""
    hp = jnp.pad(h, ((0, 0), (0, 0), (PAD, PAD), (PAD, PAD), (PAD, PAD)), mode="wrap")
    k = jnp.asarray(p["lap_w"], jnp.float32).reshape(1, 1, KSIZE, KSIZE, KSIZE)
    dn = jax.lax.conv_dimension_numbers(hp[:, :1].shape, k.shape, ("NCDHW", "OIDHW", "NCDHW"))

    def lap(x):
        return jax.lax.conv_general_dilated(x, k, (1, 1, 1), "VALID", dimension_numbers=dn,
                                            precision=jax.lax.Precision.HIGHEST)

    lap_u = lap(hp[:, 0:1])
    lap_v = lap(hp[:, 1:2])

    def pw(x, w, b):
        return (jnp.einsum("bcdhw,oc->bodhw", x, jnp.asarray(w, jnp.float32),
                           precision=jax.lax.Precision.HIGHEST)
                + jnp.asarray(b, jnp.float32)[None, :, None, None, None])

    u_nl = pw(pw(h, p["W1u"], p["b1u"]) * pw(h, p["W2u"], p["b2u"]) * pw(h, p["W3u"], p["b3u"]),
              p["W4u"], p["b4u"])
    v_nl = pw(pw(h, p["W1v"], p["b1v"]) * pw(h, p["W2v"], p["b2v"]) * pw(h, p["W3v"], p["b3v"]),
              p["W4v"], p["b4v"])
    u_res = MU_UP * jax.nn.sigmoid(jnp.float32(p["CA"])) * lap_u + u_nl
    v_res = MU_UP * jax.nn.sigmoid(jnp.float32(p["CB"])) * lap_v + v_nl
    u_next = h[:, 0:1] + u_res * DT
    v_next = h[:, 1:2] + v_res * DT
    ch = jnp.concatenate([u_next, v_next], axis=1)
    return ch, ch


# ------------------------------------------------------------------------------------ main

if __name__ == "__main__":
    hidden_channels = 8
    raw = init_params(hidden_channels)
    packed = pack_params(raw, hidden_channels)

    key = jax.random.PRNGKey(0)
    B, D, H, W = 2, 8, 8, 8          # D*H*W = 512 (multiple of 128)
    h = jax.random.normal(key, (B, 2, D, H, W), dtype=jnp.float32)

    # --- Test 1: module as specified (all-zero Laplace stencil -> no stencil kernel) ---
    ch, ch_again = rcnn_cell_forward(h, packed)
    ch = jax.block_until_ready(ch)
    ref, _ = reference_forward(h, raw)
    np.testing.assert_allclose(np.asarray(ch), np.asarray(ref), rtol=2e-5, atol=2e-5)
    np.testing.assert_allclose(np.asarray(ch_again), np.asarray(ref), rtol=2e-5, atol=2e-5)

    # --- Test 2: nonzero 5x5x5 stencil -> validates the Pallas Laplacian path and the
    #             per-channel mu_up*sigmoid(CA/CB) scaling against the XLA reference ---
    raw2 = dict(raw)
    stencil = np.zeros((KSIZE, KSIZE, KSIZE), np.float32)
    stencil[2, 2, 2] = -6.0
    for (a, b, c) in [(1, 2, 2), (3, 2, 2), (2, 1, 2), (2, 3, 2), (2, 2, 1), (2, 2, 3)]:
        stencil[a, b, c] = 1.0
    stencil[0, 0, 0] = 0.3; stencil[4, 4, 4] = -0.2
    stencil[1, 3, 0] = 0.05; stencil[4, 2, 1] = -0.07
    raw2["lap_w"] = (stencil / DX ** 2).astype(np.float32)
    packed2 = pack_params(raw2, hidden_channels)

    ch_s, _ = rcnn_cell_forward(h, packed2)
    ch_s = jax.block_until_ready(ch_s)
    ref_s, _ = reference_forward(h, raw2)
    np.testing.assert_allclose(np.asarray(ch_s), np.asarray(ref_s), rtol=2e-5, atol=2e-5)

    # --- Test 3: multi-tile grid (B=1, 16^3 -> R=32, TR=8 keeps >=4 steps for v7x) ---
    h3 = jax.random.normal(jax.random.PRNGKey(1), (1, 2, 16, 16, 16), dtype=jnp.float32)
    ch3, _ = rcnn_cell_forward(h3, packed)
    ch3 = jax.block_until_ready(ch3)
    ref3, _ = reference_forward(h3, raw)
    np.testing.assert_allclose(np.asarray(ch3), np.asarray(ref3), rtol=2e-5, atol=2e-5)

    # --- Test 4: optional bf16 state round-trip (compute stays f32; looser tolerance) ---
    ch_bf, _ = rcnn_cell_forward(h, packed, state_dtype=jnp.bfloat16)
    ch_bf = jax.block_until_ready(ch_bf)
    np.testing.assert_allclose(np.asarray(ch_bf.astype(jnp.float32)), np.asarray(ref),
                               rtol=2e-2, atol=5e-2)

    print("KERNEL_OK")
</pallas_src>

<mosaic_0001>
module attributes {stable_mosaic.version = 11 : i64} {
  func.func @kernel(%arg0: i32, %arg1: i32, %arg2: memref<22xf32, #tpu.memory_space<smem>>, %arg3: memref<1x2x4x128xf32, #tpu.memory_space<vmem>>, %arg4: memref<1x2x4x128xf32, #tpu.memory_space<vmem>>) attributes {dimension_semantics = [#tpu.dimension_semantics<parallel>, #tpu.dimension_semantics<parallel>], iteration_bounds = array<i64: 2, 1>, scalar_prefetch = 0 : i64, scratch_operands = 0 : i64, tpu.core_type = #tpu.core_type<tc>, window_params = [{transform_indices = @transform_0, window_bounds = array<i64: 22>}, {transform_indices = @transform_1, window_bounds = array<i64: 1, 2, 4, 128>}, {transform_indices = @transform_2, window_bounds = array<i64: 1, 2, 4, 128>}]} {
    %c0 = arith.constant 0 : index
    %c0_0 = arith.constant 0 : index
    %c0_1 = arith.constant 0 : index
    %c0_2 = arith.constant 0 : index
    %0 = vector.load %arg3[%c0, %c0_0, %c0_1, %c0_2] : memref<1x2x4x128xf32, #tpu.memory_space<vmem>>, vector<1x1x4x128xf32>
    %1 = vector.shape_cast %0 : vector<1x1x4x128xf32> to vector<4x128xf32>
    %c0_3 = arith.constant 0 : index
    %c1 = arith.constant 1 : index
    %c0_4 = arith.constant 0 : index
    %c0_5 = arith.constant 0 : index
    %2 = vector.load %arg3[%c0_3, %c1, %c0_4, %c0_5] : memref<1x2x4x128xf32, #tpu.memory_space<vmem>>, vector<1x1x4x128xf32>
    %3 = vector.shape_cast %2 : vector<1x1x4x128xf32> to vector<4x128xf32>
    %c2 = arith.constant 2 : index
    %4 = memref.load %arg2[%c2] : memref<22xf32, #tpu.memory_space<smem>>
    %c3 = arith.constant 3 : index
    %5 = memref.load %arg2[%c3] : memref<22xf32, #tpu.memory_space<smem>>
    %c4 = arith.constant 4 : index
    %6 = memref.load %arg2[%c4] : memref<22xf32, #tpu.memory_space<smem>>
    %c5 = arith.constant 5 : index
    %7 = memref.load %arg2[%c5] : memref<22xf32, #tpu.memory_space<smem>>
    %c6 = arith.constant 6 : index
    %8 = memref.load %arg2[%c6] : memref<22xf32, #tpu.memory_space<smem>>
    %c7 = arith.constant 7 : index
    %9 = memref.load %arg2[%c7] : memref<22xf32, #tpu.memory_space<smem>>
    %c8 = arith.constant 8 : index
    %10 = memref.load %arg2[%c8] : memref<22xf32, #tpu.memory_space<smem>>
    %c9 = arith.constant 9 : index
    %11 = memref.load %arg2[%c9] : memref<22xf32, #tpu.memory_space<smem>>
    %c10 = arith.constant 10 : index
    %12 = memref.load %arg2[%c10] : memref<22xf32, #tpu.memory_space<smem>>
    %c11 = arith.constant 11 : index
    %13 = memref.load %arg2[%c11] : memref<22xf32, #tpu.memory_space<smem>>
    %14 = vector.broadcast %7 : f32 to vector<4x128xf32>
    %15 = arith.mulf %1, %14 : vector<4x128xf32>
    %16 = vector.broadcast %6 : f32 to vector<4x128xf32>
    %17 = arith.addf %16, %15 : vector<4x128xf32>
    %18 = arith.mulf %1, %17 : vector<4x128xf32>
    %19 = vector.broadcast %5 : f32 to vector<4x128xf32>
    %20 = arith.addf %19, %18 : vector<4x128xf32>
    %21 = arith.mulf %1, %20 : vector<4x128xf32>
    %22 = vector.broadcast %4 : f32 to vector<4x128xf32>
    %23 = arith.addf %22, %21 : vector<4x128xf32>
    %24 = vector.broadcast %10 : f32 to vector<4x128xf32>
    %25 = arith.mulf %1, %24 : vector<4x128xf32>
    %26 = vector.broadcast %9 : f32 to vector<4x128xf32>
    %27 = arith.addf %26, %25 : vector<4x128xf32>
    %28 = arith.mulf %1, %27 : vector<4x128xf32>
    %29 = vector.broadcast %8 : f32 to vector<4x128xf32>
    %30 = arith.addf %29, %28 : vector<4x128xf32>
    %31 = vector.broadcast %12 : f32 to vector<4x128xf32>
    %32 = arith.mulf %1, %31 : vector<4x128xf32>
    %33 = vector.broadcast %11 : f32 to vector<4x128xf32>
    %34 = arith.addf %33, %32 : vector<4x128xf32>
    %35 = vector.broadcast %13 : f32 to vector<4x128xf32>
    %36 = arith.mulf %3, %35 : vector<4x128xf32>
    %37 = arith.addf %34, %36 : vector<4x128xf32>
    %38 = arith.mulf %3, %37 : vector<4x128xf32>
    %39 = arith.addf %30, %38 : vector<4x128xf32>
    %40 = arith.mulf %3, %39 : vector<4x128xf32>
    %41 = arith.addf %23, %40 : vector<4x128xf32>
    %cst = arith.constant 5.000000e-01 : f32
    %42 = vector.broadcast %cst : f32 to vector<4x128xf32>
    %43 = arith.mulf %41, %42 : vector<4x128xf32>
    %44 = arith.addf %1, %43 : vector<4x128xf32>
    %c0_6 = arith.constant 0 : index
    %c0_7 = arith.constant 0 : index
    %c0_8 = arith.constant 0 : index
    %c0_9 = arith.constant 0 : index
    %45 = vector.load %arg4[%c0_6, %c0_7, %c0_8, %c0_9] : memref<1x2x4x128xf32, #tpu.memory_space<vmem>>, vector<1x1x4x128xf32>
    %46 = vector.shape_cast %45 : vector<1x1x4x128xf32> to vector<4x128xf32>
    %47 = vector.shape_cast %44 : vector<4x128xf32> to vector<1x1x4x128xf32>
    tpu.vector_store %arg4[%c0_6, %c0_7, %c0_8, %c0_9], %47 {strides = array<i32>} : memref<1x2x4x128xf32, #tpu.memory_space<vmem>>, vector<1x1x4x128xf32>,
    %c12 = arith.constant 12 : index
    %48 = memref.load %arg2[%c12] : memref<22xf32, #tpu.memory_space<smem>>
    %c13 = arith.constant 13 : index
    %49 = memref.load %arg2[%c13] : memref<22xf32, #tpu.memory_space<smem>>
    %c14 = arith.constant 14 : index
    %50 = memref.load %arg2[%c14] : memref<22xf32, #tpu.memory_space<smem>>
    %c15 = arith.constant 15 : index
    %51 = memref.load %arg2[%c15] : memref<22xf32, #tpu.memory_space<smem>>
    %c16 = arith.constant 16 : index
    %52 = memref.load %arg2[%c16] : memref<22xf32, #tpu.memory_space<smem>>
    %c17 = arith.constant 17 : index
    %53 = memref.load %arg2[%c17] : memref<22xf32, #tpu.memory_space<smem>>
    %c18 = arith.constant 18 : index
    %54 = memref.load %arg2[%c18] : memref<22xf32, #tpu.memory_space<smem>>
    %c19 = arith.constant 19 : index
    %55 = memref.load %arg2[%c19] : memref<22xf32, #tpu.memory_space<smem>>
    %c20 = arith.constant 20 : index
    %56 = memref.load %arg2[%c20] : memref<22xf32, #tpu.memory_space<smem>>
    %c21 = arith.constant 21 : index
    %57 = memref.load %arg2[%c21] : memref<22xf32, #tpu.memory_space<smem>>
    %58 = vector.broadcast %51 : f32 to vector<4x128xf32>
    %59 = arith.mulf %1, %58 : vector<4x128xf32>
    %60 = vector.broadcast %50 : f32 to vector<4x128xf32>
    %61 = arith.addf %60, %59 : vector<4x128xf32>
    %62 = arith.mulf %1, %61 : vector<4x128xf32>
    %63 = vector.broadcast %49 : f32 to vector<4x128xf32>
    %64 = arith.addf %63, %62 : vector<4x128xf32>
    %65 = arith.mulf %1, %64 : vector<4x128xf32>
    %66 = vector.broadcast %48 : f32 to vector<4x128xf32>
    %67 = arith.addf %66, %65 : vector<4x128xf32>
    %68 = vector.broadcast %54 : f32 to vector<4x128xf32>
    %69 = arith.mulf %1, %68 : vector<4x128xf32>
    %70 = vector.broadcast %53 : f32 to vector<4x128xf32>
    %71 = arith.addf %70, %69 : vector<4x128xf32>
    %72 = arith.mulf %1, %71 : vector<4x128xf32>
    %73 = vector.broadcast %52 : f32 to vector<4x128xf32>
    %74 = arith.addf %73, %72 : vector<4x128xf32>
    %75 = vector.broadcast %56 : f32 to vector<4x128xf32>
    %76 = arith.mulf %1, %75 : vector<4x128xf32>
    %77 = vector.broadcast %55 : f32 to vector<4x128xf32>
    %78 = arith.addf %77, %76 : vector<4x128xf32>
    %79 = vector.broadcast %57 : f32 to vector<4x128xf32>
    %80 = arith.mulf %3, %79 : vector<4x128xf32>
    %81 = arith.addf %78, %80 : vector<4x128xf32>
    %82 = arith.mulf %3, %81 : vector<4x128xf32>
    %83 = arith.addf %74, %82 : vector<4x128xf32>
    %84 = arith.mulf %3, %83 : vector<4x128xf32>
    %85 = arith.addf %67, %84 : vector<4x128xf32>
    %cst_10 = arith.constant 5.000000e-01 : f32
    %86 = vector.broadcast %cst_10 : f32 to vector<4x128xf32>
    %87 = arith.mulf %85, %86 : vector<4x128xf32>
    %88 = arith.addf %3, %87 : vector<4x128xf32>
    %c0_11 = arith.constant 0 : index
    %c1_12 = arith.constant 1 : index
    %c0_13 = arith.constant 0 : index
    %c0_14 = arith.constant 0 : index
    %89 = vector.load %arg4[%c0_11, %c1_12, %c0_13, %c0_14] : memref<1x2x4x128xf32, #tpu.memory_space<vmem>>, vector<1x1x4x128xf32>
    %90 = vector.shape_cast %89 : vector<1x1x4x128xf32> to vector<4x128xf32>
    %91 = vector.shape_cast %88 : vector<4x128xf32> to vector<1x1x4x128xf32>
    tpu.vector_store %arg4[%c0_11, %c1_12, %c0_13, %c0_14], %91 {strides = array<i32>} : memref<1x2x4x128xf32, #tpu.memory_space<vmem>>, vector<1x1x4x128xf32>,
    return
  }
  func.func @transform_0(%arg0: i32, %arg1: i32) -> i32 {
    %c0_i32 = arith.constant 0 : i32
    %c0_i32_0 = arith.constant 0 : i32
    return %c0_i32 : i32
  }
  func.func @transform_1(%arg0: i32, %arg1: i32) -> (i32, i32, i32, i32) {
    %c0_i32 = arith.constant 0 : i32
    %c0_i32_0 = arith.constant 0 : i32
    %c0_i32_1 = arith.constant 0 : i32
    return %arg0, %c0_i32, %arg1, %c0_i32_0 : i32, i32, i32, i32
  }
  func.func @transform_2(%arg0: i32, %arg1: i32) -> (i32, i32, i32, i32) {
    %c0_i32 = arith.constant 0 : i32
    %c0_i32_0 = arith.constant 0 : i32
    %c0_i32_1 = arith.constant 0 : i32
    return %arg0, %c0_i32, %arg1, %c0_i32_0 : i32, i32, i32, i32
  }
}

</mosaic_0001>

<llo_original>
// kernel: tpu_custom_call.1
$region0: #{tpu_custom_call.1}
  #allocation0 [shape = 'u32[]', space=smem, size = 0x4, offset = 0x4, fixed_abs, tag = 'smem constant byte address 0x4 - core index']
  #allocation1 [shape = 'u32[72,128]{1,0:T(1,128)}', space=vmem, size = 0x9000, scoped, tag = 'internal scratch']
  %s0 = inlined_call_operand.hbm [shape: f32[22], index: 0, kind: input, shape index: {}]
  %s1 = inlined_call_operand.hbm [shape: f32[2,2,4,128], index: 1, kind: input, shape index: {}]
  %s2 = inlined_call_operand.hbm [shape: f32[2,2,4,128], index: 2, kind: output, shape index: {}]
  %s3 = sld [smem:[#allocation0]]
  $region49: #{tpu_custom_call.1} parent=0
    _
  %s5 = ssub.s32 1, %s3
  %s6 = scalar_select 0, %s5, %s3
  $region1: #{tpu_custom_call.1} parent=0
    #allocation2 [shape = 'u8[512]{0}', space=smem, size = 0x200, scoped, tag = 'input window, operand 0, single buffered']
    #allocation3 [shape = 's32[2]{0}', space=sflag, size = 0x8, scoped, tag = 'scoped memory for tpu_custom_call.1']
    #allocation4 [shape = 's32[2]{0}', space=sflag, size = 0x8, scoped, tag = 'scoped memory for tpu_custom_call.1']
    #allocation5 [shape = 's32[2]{0}', space=sflag, size = 0x8, scoped, tag = 'scoped memory for tpu_custom_call.1']
    #allocation6 [shape = 'u8[8192]{0}', space=vmem, size = 0x2000, scoped, tag = 'input window, operand 1']
    #allocation7 [shape = 'u8[8192]{0}', space=vmem, size = 0x2000, scoped, tag = 'output window, operand 0']
    %7 = vsyncpa [#allocation5], 0
    %8 = vsyncpa [#allocation3], 0
    %s9 = scalar_lea.sflag [#allocation3], 1
    %10 = vsyncpa %s9, 0
    %11 = vsyncpa [#allocation4], 0
    %s12 = scalar_lea.sflag [#allocation4], 1
    %13 = vsyncpa %s12, 0
    loop: start=0, step=1, limit=4
    $region2: #{tpu_custom_call.1} parent=1 // loop_pre_header
      _
    $region3: #{tpu_custom_call.1} parent=1 // loop_header
      %s15 = sphi 0, %s19
      %p16 = scmp.ge.s32.totalorder %s15, 4
      %s22 = sphi 0, %s34
      %s23 = sphi 0, %s30
      %s24 = sphi 0, %s22
      %s25 = sphi 0, %s23
      %s26 = sphi 0, %s24
      %s27 = sphi 0, %s25
      %s35 = sphi 0, %s35
      %s37 = sphi 0, %s35
      %s38 = sphi 0, %s37
      %s52 = sphi 0, %s38
      %s60 = sphi 0, %s62
      %s63 = sphi 0, %s60
      %s64 = sphi 0, %s63
      %s80 = sphi 0, %s64
      %s88 = sphi 0, %s90
      %s91 = sphi 0, %s88
      %s92 = sphi 0, %s91
      %s108 = sphi 0, %s92
    $region4: #{tpu_custom_call.1} parent=1 // loop_header_branch
      %18 = sbr.rel (%p16) target = $region8
    $region5: #{tpu_custom_call.1} parent=1 // loop_body
      %s20 = ssub.s32 %s15, 1
      %s21 = ssub.s32 %s15, 2
      %s28 = sadd.s32 1, %s23
      %p29 = scmp.ge.s32.totalorder %s28, 1
      %s30 = scalar_select %p29, 0, %s28
      %s31 = sadd.s32 1, %s22
      %s32 = scalar_select %p29, %s31, %s22
      %p33 = scmp.ge.s32.totalorder %s32, 2
      %s34 = scalar_select %p33, 0, %s32
      %s36 = sadd.s32 %s35, 1
      %p39 = scmp.eq.s32.totalorder %s15, 1
      %p40 = scmp.ne.s32.totalorder %s35, %s37
      %p41 = scmp.eq.s32.totalorder %s15, 0
      %p42 = por %p40, %p41
      %p43 = scmp.ne.s32.totalorder %s35, %s37
      %p44 = scmp.eq.s32.totalorder %s20, 1
      %p45 = por %p43, %p44
      %p46 = scmp.ne.s32.totalorder %s37, %s38
      %p47 = scmp.eq.s32.totalorder %s20, 0
      %p48 = por %p46, %p47
      %p49 = scmp.ne.s32.totalorder %s37, %s38
      %p50 = scmp.eq.s32.totalorder %s21, 1
      %p51 = por %p49, %p50
      %p53 = scmp.ne.s32.totalorder %s38, %s52
      %p54 = scmp.eq.s32.totalorder %s21, 0
      %p55 = por %p53, %p54
      %s56 = ssub.s32 %s22, %s34
      %s57 = ssub.s32 %s23, %s30
      %s58 = sor.u32 %s56, %s57
      %p59 = scmp.eq.s32.totalorder %s58, 0
      %s61 = sadd.s32 %s60, 1
      %s62 = scalar_select %p59, %s60, %s61
      %p65 = pneg %p59
      %p66 = scmp.eq.s32.totalorder %s15, 1
      %p67 = por %p65, %p66
      %p68 = scmp.ne.s32.totalorder %s60, %s63
      %p69 = scmp.eq.s32.totalorder %s15, 0
      %p70 = por %p68, %p69
      %p71 = scmp.ne.s32.totalorder %s60, %s63
      %p72 = scmp.eq.s32.totalorder %s20, 1
      %p73 = por %p71, %p72
      %p74 = scmp.ne.s32.totalorder %s63, %s64
      %p75 = scmp.eq.s32.totalorder %s20, 0
      %p76 = por %p74, %p75
      %p77 = scmp.ne.s32.totalorder %s63, %s64
      %p78 = scmp.eq.s32.totalorder %s21, 1
      %p79 = por %p77, %p78
      %p81 = scmp.ne.s32.totalorder %s64, %s80
      %p82 = scmp.eq.s32.totalorder %s21, 0
      %p83 = por %p81, %p82
      %s84 = ssub.s32 %s22, %s34
      %s85 = ssub.s32 %s23, %s30
      %s86 = sor.u32 %s84, %s85
      %p87 = scmp.eq.s32.totalorder %s86, 0
      %s89 = sadd.s32 %s88, 1
      %s90 = scalar_select %p87, %s88, %s89
      %p93 = pneg %p87
      %p94 = scmp.eq.s32.totalorder %s15, 1
      %p95 = por %p93, %p94
      %p96 = scmp.ne.s32.totalorder %s88, %s91
      %p97 = scmp.eq.s32.totalorder %s15, 0
      %p98 = por %p96, %p97
      %p99 = scmp.ne.s32.totalorder %s88, %s91
      %p100 = scmp.eq.s32.totalorder %s20, 1
      %p101 = por %p99, %p100
      %p102 = scmp.ne.s32.totalorder %s91, %s92
      %p103 = scmp.eq.s32.totalorder %s20, 0
      %p104 = por %p102, %p103
      %p105 = scmp.ne.s32.totalorder %s91, %s92
      %p106 = scmp.eq.s32.totalorder %s21, 1
      %p107 = por %p105, %p106
      %p109 = scmp.ne.s32.totalorder %s92, %s108
      %p110 = scmp.eq.s32.totalorder %s21, 0
      %p111 = por %p109, %p110
      %p112 = scmp.le.s32.totalorder 1, %s15
      %p113 = scmp.lt.s32.totalorder %s15, 3
      %p114 = pnand %p112, %p113
      %p115 = pneg %p114
      // Predicated region
      $region9: #{tpu_custom_call.1} parent=5 // pred_check
        _
      $region10: #{tpu_custom_call.1} parent=5 // pred_check_branch
        %117 = sbr.rel (%p114) target = $region12
      $region11: #{tpu_custom_call.1} parent=5 // pred_region
        %s118 = ssub.s32 %s15, 1
        // Predicated region
        $region13: #{tpu_custom_call.1} parent=11 // pred_check
          %p119 = pneg %p48
        $region14: #{tpu_custom_call.1} parent=11 // pred_check_branch
          %121 = sbr.rel (%p119) target = $region16
        $region15: #{tpu_custom_call.1} parent=11 // pred_region
          %123 = vsyncadd [#allocation5], 0
          %s125 = sshll.u32 %s0, 4
          %s126 = int_to_ptr.hbm [resolvable:$true] %s125
          %128 = dma.hbm_to_smem %s126, 16, [#allocation2], [#allocation5]
        $region16: #{tpu_custom_call.1} parent=11 // pred_fallthru
          _
      $region12: #{tpu_custom_call.1} parent=5 // pred_fallthru
        _
      %p129 = scmp.lt.s32.totalorder %s15, 2
      // Predicated region
      $region17: #{tpu_custom_call.1} parent=5 // pred_check
        %p130 = pneg %p129
      $region18: #{tpu_custom_call.1} parent=5 // pred_check_branch
        %132 = sbr.rel (%p130) target = $region20
      $region19: #{tpu_custom_call.1} parent=5 // pred_region
        // Predicated region
        $region21: #{tpu_custom_call.1} parent=19 // pred_check
          %p133 = pneg %p70
        $region22: #{tpu_custom_call.1} parent=19 // pred_check_branch
          %135 = sbr.rel (%p133) target = $region24
        $region23: #{tpu_custom_call.1} parent=19 // pred_region
          %s136 = sand.u32 %s60, 1
          %s137 = scalar_lea.sflag [#allocation3], %s136
          %s138 = sand.u32 %s60, 1
          %s139 = smul.addr %s138, 8
          %s140 = scalar_lea.vmem [#allocation6], %s139
          %142 = vsyncadd %s137, 0
          %s143 = smul.addr %s22, 2
          %s144 = sadd.s32 %s23, %s143
          %s145 = smul.addr %s144, 4
          %s146 = scalar_lea.hbm %s1, %s145
          %s147 = sshll.u32 %s146, 4
          %s148 = int_to_ptr.hbm [resolvable:$true] %s147
          %s149 = sshll.u32 %s140, 4
          %s150 = int_to_ptr.vmem [resolvable:$true] %s149
          %155 = dma.hbm_to_vmem [thread:$0]  %s148, 128, %s150, %s137, 64, 64, 4
        $region24: #{tpu_custom_call.1} parent=19 // pred_fallthru
          _
      $region20: #{tpu_custom_call.1} parent=5 // pred_fallthru
        _
      %p156 = scmp.le.s32.totalorder 1, %s15
      %p157 = scmp.lt.s32.totalorder %s15, 3
      %p158 = pnand %p156, %p157
      %p159 = pneg %p158
      // Predicated region
      $region25: #{tpu_custom_call.1} parent=5 // pred_check
        _
      $region26: #{tpu_custom_call.1} parent=5 // pred_check_branch
        %161 = sbr.rel (%p158) target = $region28
      $region27: #{tpu_custom_call.1} parent=5 // pred_region
        %s162 = ssub.s32 %s15, 1
        // Predicated region
        $region29: #{tpu_custom_call.1} parent=27 // pred_check
          %p163 = pneg %p48
        $region30: #{tpu_custom_call.1} parent=27 // pred_check_branch
          %165 = sbr.rel (%p163) target = $region32
        $region31: #{tpu_custom_call.1} parent=27 // pred_region
          %167 = dma.done [#allocation5], 16
        $region32: #{tpu_custom_call.1} parent=27 // pred_fallthru
          _
        %s168 = sand.u32 %s63, 1
        %s169 = scalar_lea.sflag [#allocation3], %s168
        %s170 = sand.u32 %s63, 1
        %s171 = smul.addr %s170, 8
        %s172 = scalar_lea.vmem [#allocation6], %s171
        // Predicated region
        $region33: #{tpu_custom_call.1} parent=27 // pred_check
          %p173 = pneg %p76
        $region34: #{tpu_custom_call.1} parent=27 // pred_check_branch
          %175 = sbr.rel (%p173) target = $region36
        $region35: #{tpu_custom_call.1} parent=27 // pred_region
          %177 = dma.done %s169, 128
        $region36: #{tpu_custom_call.1} parent=27 // pred_fallthru
          _
        %178 = sfence
        %p179 = pneg %p48
        %p180 = pneg %p45
        %s181 = sand.u32 %s63, 1
        %s182 = scalar_lea.sflag [#allocation3], %s181
        %s183 = sand.u32 %s63, 1
        %s184 = smul.addr %s183, 8
        %s185 = scalar_lea.vmem [#allocation6], %s184
        %p186 = pneg %p76
        %p187 = pneg %p73
        %p188 = pneg %p104
        %p189 = pneg %p101
        %s190 = sand.u32 %s91, 1
        %s191 = scalar_lea.sflag [#allocation4], %s190
        %s192 = sand.u32 %s91, 1
        %s193 = smul.addr %s192, 8
        %s194 = scalar_lea.vmem [#allocation7], %s193
        %v195 = vld [vmem:[%s172] sm:$0xf]
        %s196 = scalar_lea.vmem %s172, 4 [#allocation6]
        %v197 = vld [vmem:[%s196] sm:$0xf]
        %s198 = sld [smem:[#allocation2 + $0x2]]
        %s199 = sld [smem:[#allocation2 + $0x3]]
        %s200 = sld [smem:[#allocation2 + $0x4]]
        %s201 = sld [smem:[#allocation2 + $0x5]]
        %s202 = sld [smem:[#allocation2 + $0x6]]
        %s203 = sld [smem:[#allocation2 + $0x7]]
        %s204 = sld [smem:[#allocation2 + $0x8]]
        %s205 = sld [smem:[#allocation2 + $0x9]]
        %s206 = sld [smem:[#allocation2 + $0xa]]
        %s207 = sld [smem:[#allocation2 + $0xb]]
        %v208 = vstv %s201
        %v209 = vmul.f32 %v195, %v208
        %v210 = vstv %s200
        %v211 = vadd.f32 %v210, %v209
        %v212 = vmul.f32 %v195, %v211
        %v213 = vstv %s199
        %v214 = vadd.f32 %v213, %v212
        %v215 = vmul.f32 %v195, %v214
        %v216 = vstv %s198
        %v217 = vadd.f32 %v216, %v215
        %v218 = vstv %s204
        %v219 = vmul.f32 %v195, %v218
        %v220 = vstv %s203
        %v221 = vadd.f32 %v220, %v219
        %v222 = vmul.f32 %v195, %v221
        %v223 = vstv %s202
        %v224 = vadd.f32 %v223, %v222
        %v225 = vstv %s206
        %v226 = vmul.f32 %v195, %v225
        %v227 = vstv %s205
        %v228 = vadd.f32 %v227, %v226
        %v229 = vstv %s207
        %v230 = vmul.f32 %v197, %v229
        %v231 = vadd.f32 %v228, %v230
        %v232 = vmul.f32 %v197, %v231
        %v233 = vadd.f32 %v224, %v232
        %v234 = vmul.f32 %v197, %v233
        %v235 = vadd.f32 %v217, %v234
        %v236 = vmul.f32 %v235, 0.5
        %v237 = vadd.f32 %v195, %v236
        %238 = vst [vmem:[%s194] sm:$0xf] %v237
        %s239 = sld [smem:[#allocation2 + $0xc]]
        %s240 = sld [smem:[#allocation2 + $0xd]]
        %s241 = sld [smem:[#allocation2 + $0xe]]
        %s242 = sld [smem:[#allocation2 + $0xf]]
        %s243 = sld [smem:[#allocation2 + $0x10]]
        %s244 = sld [smem:[#allocation2 + $0x11]]
        %s245 = sld [smem:[#allocation2 + $0x12]]
        %s246 = sld [smem:[#allocation2 + $0x13]]
        %s247 = sld [smem:[#allocation2 + $0x14]]
        %s248 = sld [smem:[#allocation2 + $0x15]]
        %v249 = vstv %s242
        %v250 = vmul.f32 %v195, %v249
        %v251 = vstv %s241
        %v252 = vadd.f32 %v251, %v250
        %v253 = vmul.f32 %v195, %v252
        %v254 = vstv %s240
        %v255 = vadd.f32 %v254, %v253
        %v256 = vmul.f32 %v195, %v255
        %v257 = vstv %s239
        %v258 = vadd.f32 %v257, %v256
        %v259 = vstv %s245
        %v260 = vmul.f32 %v195, %v259
        %v261 = vstv %s244
        %v262 = vadd.f32 %v261, %v260
        %v263 = vmul.f32 %v195, %v262
        %v264 = vstv %s243
        %v265 = vadd.f32 %v264, %v263
        %v266 = vstv %s247
        %v267 = vmul.f32 %v195, %v266
        %v268 = vstv %s246
        %v269 = vadd.f32 %v268, %v267
        %v270 = vstv %s248
        %v271 = vmul.f32 %v197, %v270
        %v272 = vadd.f32 %v269, %v271
        %v273 = vmul.f32 %v197, %v272
        %v274 = vadd.f32 %v265, %v273
        %v275 = vmul.f32 %v197, %v274
        %v276 = vadd.f32 %v258, %v275
        %v277 = vmul.f32 %v276, 0.5
        %v278 = vadd.f32 %v197, %v277
        %s279 = scalar_lea.vmem %s194, 4 [#allocation7]
        %280 = vst [vmem:[%s279] sm:$0xf] %v278
        %s281 = sand.u32 %s91, 1
        %s282 = scalar_lea.sflag [#allocation4], %s281
        %s283 = sand.u32 %s91, 1
        %s284 = smul.addr %s283, 8
        %s285 = scalar_lea.vmem [#allocation7], %s284
        // Predicated region
        $region37: #{tpu_custom_call.1} parent=27 // pred_check
          %p286 = pneg %p101
        $region38: #{tpu_custom_call.1} parent=27 // pred_check_branch
          %288 = sbr.rel (%p286) target = $region40
        $region39: #{tpu_custom_call.1} parent=27 // pred_region
          %290 = vsyncadd %s282, 0
          %s291 = smul.addr %s24, 2
          %s292 = sadd.s32 %s25, %s291
          %s293 = smul.addr %s292, 4
          %s294 = scalar_lea.hbm %s2, %s293
          %s295 = sshll.u32 %s285, 4
          %s296 = int_to_ptr.vmem [resolvable:$true] %s295
          %s297 = sshll.u32 %s294, 4
          %s298 = int_to_ptr.hbm [resolvable:$true] %s297
          %303 = dma.vmem_to_hbm [thread:$0]  %s296, 128, %s298, %s282, 64, 64, 4
        $region40: #{tpu_custom_call.1} parent=27 // pred_fallthru
          _
      $region28: #{tpu_custom_call.1} parent=5 // pred_fallthru
        _
      %p304 = scmp.le.s32.totalorder 2, %s15
      // Predicated region
      $region41: #{tpu_custom_call.1} parent=5 // pred_check
        %p305 = pneg %p304
      $region42: #{tpu_custom_call.1} parent=5 // pred_check_branch
        %307 = sbr.rel (%p305) target = $region44
      $region43: #{tpu_custom_call.1} parent=5 // pred_region
        %s308 = ssub.s32 %s15, 2
        // Predicated region
        $region45: #{tpu_custom_call.1} parent=43 // pred_check
          %p309 = pneg %p107
        $region46: #{tpu_custom_call.1} parent=43 // pred_check_branch
          %311 = sbr.rel (%p309) target = $region48
        $region47: #{tpu_custom_call.1} parent=43 // pred_region
          %s312 = sand.u32 %s92, 1
          %s313 = scalar_lea.sflag [#allocation4], %s312
          %s314 = sand.u32 %s92, 1
          %s315 = smul.addr %s314, 8
          %s316 = scalar_lea.vmem [#allocation7], %s315
          %318 = dma.done %s313, 128
        $region48: #{tpu_custom_call.1} parent=43 // pred_fallthru
          _
      $region44: #{tpu_custom_call.1} parent=5 // pred_fallthru
        _
    $region6: #{tpu_custom_call.1} parent=1 // loop_footer
      %s19 = sadd.s32 1, %s15
    $region7: #{tpu_custom_call.1} parent=1 // loop_footer_branch
      %14 = sbr.rel target = $region3
    $region8: #{tpu_custom_call.1} parent=1 // loop_exit
      _
    %319 = vsyncpa [#allocation3], 1
    %s320 = scalar_lea.sflag [#allocation3], 1
    %321 = vsyncpa %s320, 1
    %322 = vsyncpa [#allocation4], 1
    %s323 = scalar_lea.sflag [#allocation4], 1
    %324 = vsyncpa %s323, 1
    %325 = vsyncpa [#allocation5], 1
    %s326 = scalar_lea.sflag [#allocation5], 1
    %327 = vsyncpa %s326, 1

</llo_original>
